<compile_context>
chip_gen: v7x
topology: tpu7x:2x2x1
jax: 0.10.0
libtpu: 0.0.40
codegen_flags: <defaults>
</compile_context>

<pallas_src>
import functools

import jax
import jax.numpy as jnp
from jax.experimental import pallas as pl
from jax.experimental.pallas import tpu as pltpu


def _cdiv(a, b):
    return -(-a // b)


def _round_up(a, b):
    return _cdiv(a, b) * b


# ---------------------------------------------------------------------------
# Kernels
# ---------------------------------------------------------------------------
def _small_kernel(x_ref, w_ref, b_ref, o_ref):
    """Whole problem in one block (tiny shapes): fused matmul + bias + SiLU."""
    v1 = jnp.dot(x_ref[...], w_ref[...], preferred_element_type=jnp.float32)
    v1 = v1 + b_ref[...].astype(jnp.float32)
    o_ref[...] = (v1 * jax.nn.sigmoid(v1)).astype(o_ref.dtype)


def _tiled_kernel_direct(x_ref, w_ref, b_ref, o_ref):
    """f32 output: accumulate directly into the resident output block."""
    k = pl.program_id(2)
    part = jnp.dot(x_ref[...], w_ref[...], preferred_element_type=jnp.float32)

    @pl.when(k == 0)
    def _init():
        o_ref[...] = part

    @pl.when(k > 0)
    def _accum():
        o_ref[...] += part

    @pl.when(k == pl.num_programs(2) - 1)
    def _epilogue():
        v1 = o_ref[...] + b_ref[...].astype(jnp.float32)
        o_ref[...] = v1 * jax.nn.sigmoid(v1)


def _tiled_kernel_acc(x_ref, w_ref, b_ref, o_ref, acc_ref):
    """Narrow (non-f32) output: keep an f32 VMEM accumulator scratch."""
    k = pl.program_id(2)

    @pl.when(k == 0)
    def _init():
        acc_ref[...] = jnp.zeros_like(acc_ref)

    acc_ref[...] += jnp.dot(
        x_ref[...], w_ref[...], preferred_element_type=jnp.float32
    )

    @pl.when(k == pl.num_programs(2) - 1)
    def _epilogue():
        v1 = acc_ref[...] + b_ref[...].astype(jnp.float32)
        o_ref[...] = (v1 * jax.nn.sigmoid(v1)).astype(o_ref.dtype)


# ---------------------------------------------------------------------------
# Wrapper
# ---------------------------------------------------------------------------
@functools.partial(
    jax.jit, static_argnames=("tm", "tn", "tk", "compute_dtype")
)
def linear_silu(x, w_io, bias, *, tm=512, tn=512, tk=1024, compute_dtype=None):
    """Fused Linear + SiLU.

    x:    (M, K)  activations
    w_io: (K, N)  weight stored transposed once (PyTorch weight is (N, K))
    bias: (N,)
    compute_dtype: optional narrower matmul-input dtype (e.g. jnp.bfloat16);
                   accumulation and the epilogue stay in f32.
    """
    M, K = x.shape
    Kw, N = w_io.shape
    assert Kw == K and bias.shape == (N,)
    out_dtype = x.dtype
    b2 = bias.reshape(1, N)

    # --- Tiny-problem short circuit (e.g. the spec's batch=1, 32x32 case) ----
    # Single block, no grid, no padding, no pipeline setup.
    if 2 * M * K * N <= (1 << 22) and (M * K + K * N + M * N) * 4 <= (2 << 20):
        return pl.pallas_call(
            _small_kernel,
            out_shape=jax.ShapeDtypeStruct((M, N), out_dtype),
        )(x, w_io, b2)

    # --- Optional bf16 input path (f32 accumulation retained) ---------------
    cdt = jnp.dtype(compute_dtype) if compute_dtype is not None else jnp.dtype(x.dtype)
    xk = x.astype(cdt)
    wk = w_io.astype(cdt)

    # --- Tile selection ------------------------------------------------------
    # Block dims <= full array dim are always legal ("equal full dim" rule),
    # and clamping to M/N exactly avoids wasted MXU work / weight DMA.
    tm = min(tm, M)
    tn = min(tn, N)

    # K: single step (tk = K) when it fits, else lane-aligned tk + zero-pad K.
    if K <= tk:
        tk = K
        Kp = K
    else:
        tk = _round_up(tk, 128)
        Kp = _round_up(K, tk)

    # Megacore (v7x, 2 TCs): guarantee >= 2 blocks on the parallel axes.
    if _cdiv(M, tm) * _cdiv(N, tn) < 2:
        if N > 128:
            tn = _round_up(_cdiv(N, 2), 128)
        elif M > 8:
            tm = _round_up(_cdiv(M, 2), 8)

    grid = (_cdiv(M, tm), _cdiv(N, tn), Kp // tk)

    # Zero-pad only the reduction axis (M/N partial edge blocks are masked by
    # Pallas; OOB garbage there never reaches valid output elements).
    if Kp != K:
        xk = jnp.pad(xk, ((0, 0), (0, Kp - K)))
        wk = jnp.pad(wk, ((0, Kp - K), (0, 0)))

    # --- Kernel variant + VMEM budget ----------------------------------------
    f32_out = jnp.dtype(out_dtype) == jnp.dtype(jnp.float32)
    if f32_out:
        kernel = _tiled_kernel_direct
        scratch = []
    else:
        kernel = _tiled_kernel_acc
        scratch = [pltpu.VMEM((tm, tn), jnp.float32)]

    in_item = cdt.itemsize
    out_item = jnp.dtype(out_dtype).itemsize
    vmem_needed = (
        2 * tm * tk * in_item            # x tiles (double-buffered)
        + 2 * tk * tn * in_item          # w tiles
        + 2 * tm * tn * out_item         # out tiles
        + 2 * tn * 4                     # bias tiles
        + (tm * tn * 4 if not f32_out else 0)  # acc scratch
    )
    vmem_limit = int(min(48 << 20, max(16 << 20, 2 * vmem_needed)))

    return pl.pallas_call(
        kernel,
        out_shape=jax.ShapeDtypeStruct((M, N), out_dtype),
        grid_spec=pltpu.PrefetchScalarGridSpec(
            num_scalar_prefetch=0,
            grid=grid,
            in_specs=[
                pl.BlockSpec((tm, tk), lambda i, j, k: (i, k)),   # x tile
                pl.BlockSpec((tk, tn), lambda i, j, k: (k, j)),   # weight tile
                pl.BlockSpec((1, tn), lambda i, j, k: (0, j)),    # bias tile
            ],
            out_specs=pl.BlockSpec((tm, tn), lambda i, j, k: (i, j)),
            scratch_shapes=scratch,
        ),
        compiler_params=pltpu.CompilerParams(
            dimension_semantics=("parallel", "parallel", "arbitrary"),
            vmem_limit_bytes=vmem_limit,
        ),
        # TODO(synk): if a v5e profile shows exposed weight DMA, add
        # pipeline_mode=pl.Buffered(3) on the weight BlockSpec.
    )(xk, wk, b2)


# ---------------------------------------------------------------------------
# Self-test
# ---------------------------------------------------------------------------
if __name__ == "__main__":
    key = jax.random.PRNGKey(0)

    def reference(x, w_oi, b):
        v1 = x @ w_oi.T + b
        return v1 * jax.nn.sigmoid(v1)

    # --- Case 1: the module's spec shapes (batch=1, in=32, out=32) ----------
    in_feature, out_feature, batch = 32, 32, 1
    kx, kw, kb, kx2, kw2, kb2 = jax.random.split(key, 6)

    x1 = jax.random.normal(kx, (batch, in_feature), dtype=jnp.float32)
    w_oi = jax.random.normal(kw, (out_feature, in_feature), dtype=jnp.float32) * 0.1
    b = jax.random.normal(kb, (out_feature,), dtype=jnp.float32) * 0.1
    w_io = jnp.asarray(w_oi.T)  # stored once in (in, out) layout — not per call

    out = linear_silu(x1, w_io, b)
    jax.block_until_ready(out)
    assert out.shape == (batch, out_feature)
    assert jnp.allclose(out, reference(x1, w_oi, b), atol=2e-3, rtol=2e-3), \
        "mismatch vs reference (case 1: tiny path)"

    # --- Case 2: ragged multi-tile shape, default tiles (f32) ----------------
    M2, K2, N2 = 200, 384, 320
    x2 = jax.random.normal(kx2, (M2, K2), dtype=jnp.float32) * 0.5
    w2_oi = jax.random.normal(kw2, (N2, K2), dtype=jnp.float32) * 0.05
    b2 = jax.random.normal(kb2, (N2,), dtype=jnp.float32) * 0.1
    w2_io = jnp.asarray(w2_oi.T)
    ref2 = reference(x2, w2_oi, b2)

    out2 = linear_silu(x2, w2_io, b2)
    jax.block_until_ready(out2)
    assert out2.shape == (M2, N2)
    assert jnp.allclose(out2, ref2, atol=2e-3, rtol=2e-3), \
        "mismatch vs reference (case 2: tiled f32, default tiles)"

    # --- Case 3: forced K-reduction grid + K zero-pad (tk=256, K=384) --------
    out3 = linear_silu(x2, w2_io, b2, tm=128, tn=128, tk=256)
    jax.block_until_ready(out3)
    assert jnp.allclose(out3, ref2, atol=2e-3, rtol=2e-3), \
        "mismatch vs reference (case 3: multi-step K reduction)"

    # --- Case 4: bf16 compute path (f32 accumulation / epilogue) -------------
    out4 = linear_silu(x2, w2_io, b2, compute_dtype=jnp.bfloat16)
    jax.block_until_ready(out4)
    assert jnp.allclose(out4, ref2, atol=5e-2, rtol=5e-2), \
        "mismatch vs reference (case 4: bf16 inputs)"

    print("KERNEL_OK")
</pallas_src>

<mosaic_0001>
module attributes {stable_mosaic.version = 11 : i64} {
  func.func @_small_kernel(%arg0: memref<1x32xf32, #tpu.memory_space<vmem>>, %arg1: memref<32x32xf32, #tpu.memory_space<vmem>>, %arg2: memref<1x32xf32, #tpu.memory_space<vmem>>, %arg3: memref<1x32xf32, #tpu.memory_space<vmem>>) attributes {dimension_semantics = [], scalar_prefetch = 0 : i64, scratch_operands = 0 : i64, tpu.core_type = #tpu.core_type<tc>} {
    %c0 = arith.constant 0 : index
    %c0_0 = arith.constant 0 : index
    %0 = vector.load %arg0[%c0, %c0_0] : memref<1x32xf32, #tpu.memory_space<vmem>>, vector<1x32xf32>
    %c0_1 = arith.constant 0 : index
    %c0_2 = arith.constant 0 : index
    %1 = vector.load %arg1[%c0_1, %c0_2] : memref<32x32xf32, #tpu.memory_space<vmem>>, vector<32x32xf32>
    %cst = arith.constant dense<0.000000e+00> : vector<1x32xf32>
    %2 = tpu.matmul %0, %1, %cst {dimension_numbers = #tpu.dot_dimension_numbers<[1], [0], [0], [1], [0, 0, 1, 1], [], []>} : vector<1x32xf32>, vector<32x32xf32>, vector<1x32xf32> -> vector<1x32xf32>
    %c0_3 = arith.constant 0 : index
    %c0_4 = arith.constant 0 : index
    %3 = vector.load %arg2[%c0_3, %c0_4] : memref<1x32xf32, #tpu.memory_space<vmem>>, vector<1x32xf32>
    %4 = arith.addf %2, %3 : vector<1x32xf32>
    %5 = arith.negf %4 : vector<1x32xf32>
    %6 = math.exp %5 : vector<1x32xf32>
    %cst_5 = arith.constant 1.000000e+00 : f32
    %7 = vector.broadcast %cst_5 : f32 to vector<1x32xf32>
    %8 = arith.addf %7, %6 : vector<1x32xf32>
    %9 = arith.divf %7, %8 : vector<1x32xf32>
    %10 = arith.mulf %4, %9 : vector<1x32xf32>
    %c0_6 = arith.constant 0 : index
    %c0_7 = arith.constant 0 : index
    %11 = vector.load %arg3[%c0_6, %c0_7] : memref<1x32xf32, #tpu.memory_space<vmem>>, vector<1x32xf32>
    tpu.vector_store %arg3[%c0_6, %c0_7], %10 {strides = array<i32>} : memref<1x32xf32, #tpu.memory_space<vmem>>, vector<1x32xf32>,
    return
  }
}

</mosaic_0001>

<llo_original>
// kernel: linear_silu.1
$region0: #{linear_silu.1}
  #allocation0 [shape = 'u32[]', space=smem, size = 0x4, offset = 0x4, fixed_abs, tag = 'smem constant byte address 0x4 - core index']
  #allocation1 [shape = 'u32[144,128]{1,0:T(1,128)}', space=vmem, size = 0x12000, scoped, tag = 'internal scratch']
  %s0 = inlined_call_operand.vmem [shape: f32[1,32], index: 0, kind: input, shape index: {}]
  %s1 = inlined_call_operand.hbm [shape: f32[32,32], index: 1, kind: input, shape index: {}]
  %s2 = inlined_call_operand.vmem [shape: f32[1,32], index: 2, kind: input, shape index: {}]
  %s3 = inlined_call_operand.hbm [shape: f32[1,32], index: 3, kind: output, shape index: {}]
  %s4 = sld [smem:[#allocation0]]
  $region26: #{linear_silu.1} parent=0
    _
  %s6 = ssub.s32 1, %s4
  %s7 = scalar_select 0, %s6, %s4
  $region1: #{linear_silu.1} parent=0
    #allocation2 [shape = 'u8[16384]{0}', space=vmem, size = 0x4000, scoped, tag = 'input window, operand 1, single buffered']
    #allocation3 [shape = 's32[1]{0}', space=sflag, size = 0x4, scoped, tag = 'scoped memory for linear_silu.1']
    #allocation4 [shape = 's32[1]{0}', space=sflag, size = 0x4, scoped, tag = 'scoped memory for linear_silu.1']
    #allocation5 [shape = 'u8[512]{0}', space=vmem, size = 0x400, scoped, tag = 'output window, operand 0, single buffered']
    %8 = vsyncpa [#allocation3], 0
    %9 = vsyncpa [#allocation4], 0
    // Predicated region
    $region2: #{linear_silu.1} parent=1 // pred_check
      _
    $region3: #{linear_silu.1} parent=1 // pred_check_branch
      %11 = sbr.rel (0) target = $region5
    $region4: #{linear_silu.1} parent=1 // pred_region
      _
    $region5: #{linear_silu.1} parent=1 // pred_fallthru
      _
    // Predicated region
    $region6: #{linear_silu.1} parent=1 // pred_check
      _
    $region7: #{linear_silu.1} parent=1 // pred_check_branch
      %13 = sbr.rel (0) target = $region9
    $region8: #{linear_silu.1} parent=1 // pred_region
      %s15 = ssub.s32 512, 512
      %16 = vsyncadd [#allocation3], %s15
      %s17 = sshll.u32 [#allocation2], 4
      %s18 = int_to_ptr.vmem [resolvable:$true] %s17
      %23 = dma.hbm_to_vmem [thread:$0]  %s1, 512, %s18, [#allocation3], 128, 128, 8
    $region9: #{linear_silu.1} parent=1 // pred_fallthru
      _
    // Predicated region
    $region10: #{linear_silu.1} parent=1 // pred_check
      _
    $region11: #{linear_silu.1} parent=1 // pred_check_branch
      %25 = sbr.rel (0) target = $region13
    $region12: #{linear_silu.1} parent=1 // pred_region
      _
    $region13: #{linear_silu.1} parent=1 // pred_fallthru
      _
    // Predicated region
    $region14: #{linear_silu.1} parent=1 // pred_check
      _
    $region15: #{linear_silu.1} parent=1 // pred_check_branch
      %27 = sbr.rel (0) target = $region17
    $region16: #{linear_silu.1} parent=1 // pred_region
      %28 = dma.done [#allocation3], 512
    $region17: #{linear_silu.1} parent=1 // pred_fallthru
      _
    %v29 = vld [vmem:[%s0] sm:$0x1]
    %v30 = vld [vmem:[#allocation2] sm:$0xff]
    %v31 = vld [vmem:[#allocation2 + $0x8] sm:$0xff]
    %v32 = vld [vmem:[#allocation2 + $0x10] sm:$0xff]
    %v33 = vld [vmem:[#allocation2 + $0x18] sm:$0xff]
    %v34 = vld [vmem:[%s2] sm:$0x1]
    %vm35 = vcmask 261120
    %v37 = vsel %vm35, %v29, 0
    %39 = vmatprep.subr.mxu0 0.0
    %40 = vmatpush1.msra.mxu0 %v30
    %41 = vmatprep.subr.mxu0 0.0
    %42 = vmatpush1.msra.mxu0 %v31
    %43 = vmatprep.subr.mxu0 0.0
    %44 = vmatpush1.msra.mxu0 %v32
    %45 = vmatprep.subr.mxu0 0.0
    %46 = vmatpush1.msra.mxu0 %v33
    %47 = vmatprep.subr.mxu0 0.0
    %48 = vmatpush1.msra.mxu0 0.0
    %49 = vmatprep.subr.mxu0 0.0
    %50 = vmatpush1.msra.mxu0 0.0
    %51 = vmatprep.subr.mxu0 0.0
    %52 = vmatpush1.msra.mxu0 0.0
    %53 = vmatprep.subr.mxu0 0.0
    %54 = vmatpush1.msra.mxu0 0.0
    %55 = vmatprep.subr.mxu0 0.0
    %56 = vmatpush1.msra.mxu0 0.0
    %57 = vmatprep.subr.mxu0 0.0
    %58 = vmatpush1.msra.mxu0 0.0
    %59 = vmatprep.subr.mxu0 0.0
    %60 = vmatpush1.msra.mxu0 0.0
    %61 = vmatprep.subr.mxu0 0.0
    %62 = vmatpush1.msra.mxu0 0.0
    %63 = vmatprep.subr.mxu0 0.0
    %64 = vmatpush1.msra.mxu0 0.0
    %65 = vmatprep.subr.mxu0 0.0
    %66 = vmatpush1.msra.mxu0 0.0
    %67 = vmatprep.subr.mxu0 0.0
    %68 = vmatpush1.msra.mxu0 0.0
    %69 = vmatprep.subr.mxu0 0.0
    %70 = vmatpush1.msra.mxu0 0.0
    %71 = vmatprep.subr.mxu0 0.0
    %72 = vmatpush1.msra.mxu0 0.0
    %73 = vmatprep.subr.mxu0 0.0
    %74 = vmatpush1.msra.mxu0 0.0
    %75 = vmatprep.subr.mxu0 0.0
    %76 = vmatpush1.msra.mxu0 0.0
    %77 = vmatprep.subr.mxu0 0.0
    %78 = vmatpush1.msra.mxu0 0.0
    %79 = vmatprep.subr.mxu0 0.0
    %80 = vmatpush1.msra.mxu0 0.0
    %81 = vmatprep.subr.mxu0 0.0
    %82 = vmatpush1.msra.mxu0 0.0
    %83 = vmatprep.subr.mxu0 0.0
    %84 = vmatpush1.msra.mxu0 0.0
    %85 = vmatprep.subr.mxu0 0.0
    %86 = vmatpush1.msra.mxu0 0.0
    %87 = vmatprep.subr.mxu0 0.0
    %88 = vmatpush1.msra.mxu0 0.0
    %89 = vmatprep.subr.mxu0 0.0
    %90 = vmatpush1.msra.mxu0 0.0
    %91 = vmatprep.subr.mxu0 0.0
    %92 = vmatpush1.msra.mxu0 0.0
    %93 = vmatprep.subr.mxu0 0.0
    %94 = vmatpush1.msra.mxu0 0.0
    %95 = vmatprep.subr.mxu0 0.0
    %96 = vmatpush1.msra.mxu0 0.0
    %97 = vmatprep.subr.mxu0 0.0
    %98 = vmatpush1.msra.mxu0 0.0
    %99 = vmatprep.subr.mxu0 0.0
    %100 = vmatpush1.msra.mxu0 0.0
    %101 = vmatprep.subr.mxu0 0.0
    %102 = vmatpush1.msra.mxu0 0.0
    %103 = vmatprep.mubr.f32.mxu0 0.0
    %104 = vmatmul.mubr.f32.gmra.mrb[0].mxu0 %v37
    %v105 = vpop.f32.mrb[0].mxu0
    %v106 = vadd.f32 %v34, %v105
    %v107 = vpop.f32.mrb[0].mxu0
    %108 = vdwg.mxu0
    %v109 = vxor.u32 %v106, 2147483648
    %v110 = vmul.f32 %v109, 1.442695
    %v111 = vpow.pop %v110
    %v112 = vadd.f32 %v111, 1.0
    %v113 = vrcp.pop %v112
    %v114 = vmul.f32 1.0, %v113
    %v115 = vmul.f32 %v106, %v114
    %vm116 = vcmask 253952
    %117 = vst.msk [vmem:[#allocation5] sm:$0x1] %vm116, %v115
    // Predicated region
    $region18: #{linear_silu.1} parent=1 // pred_check
      _
    $region19: #{linear_silu.1} parent=1 // pred_check_branch
      %119 = sbr.rel (0) target = $region21
    $region20: #{linear_silu.1} parent=1 // pred_region
      %s121 = ssub.s32 16, 16
      %122 = vsyncadd [#allocation4], %s121
      %s124 = sshll.u32 [#allocation5], 4
      %s125 = int_to_ptr.vmem [resolvable:$true] %s124
      %127 = dma.vmem_to_hbm [thread:$0]  %s125, 16, %s3, [#allocation4]
    $region21: #{linear_silu.1} parent=1 // pred_fallthru
      _
    // Predicated region
    $region22: #{linear_silu.1} parent=1 // pred_check
      _
    $region23: #{linear_silu.1} parent=1 // pred_check_branch
      %129 = sbr.rel (0) target = $region25
    $region24: #{linear_silu.1} parent=1 // pred_region
      %130 = dma.done [#allocation4], 16
    $region25: #{linear_silu.1} parent=1 // pred_fallthru
      _
    %131 = vsyncpa [#allocation3], 1
    %132 = vsyncpa [#allocation4], 1

</llo_original>
